<compile_context>
chip_gen: v7x
topology: tpu7x:2x2x1
jax: 0.10.0
libtpu: 0.0.40
codegen_flags: <defaults>
</compile_context>

<pallas_src>
import functools

import jax
import jax.numpy as jnp
from jax.experimental import pallas as pl
from jax.experimental.pallas import tpu as pltpu


def _sse_kernel(xu_ref, Wxu_ref, W1_ref, b1_ref, W2_ref, b2_ref, Ww_ref,
                out_ref, *, Nz):
    """Feature-major fused forward.

    xu_ref : (Nx+Nu, Bt)          stacked [x; u], batch on lanes
    Wxu_ref: (Nz+Ny+Nx, Nx+Nu)    fused [Cz|Dzu ; C|D ; A|Bsys]
    W1_ref : (Nh, Nz), b1_ref: (Nh, 1)
    W2_ref : (Nw, Nh), b2_ref: (Nw, 1)
    Ww_ref : (Ny+Nx, Nw)          fused [Dyw ; Bw]
    out_ref: (Ny+Nx, Bt)          rows [y_k ; x_plus], batch on lanes
    """
    f32 = jnp.float32
    xu = xu_ref[...]

    # One fused matmul -> [z ; h(x,u) ; f(x,u)]  (feature-major)
    zfh = jnp.dot(Wxu_ref[...], xu, preferred_element_type=f32)
    z = zfh[:Nz]          # (Nz, Bt)
    sys_out = zfh[Nz:]    # (Ny+Nx, Bt) = [h(x,u) ; f(x,u)]

    # Static 2-layer MLP (tanh), feature-major.
    h = jnp.tanh(jnp.dot(W1_ref[...], z, preferred_element_type=f32)
                 + b1_ref[...])
    w = jnp.dot(W2_ref[...], h, preferred_element_type=f32) + b2_ref[...]

    # One fused matmul -> [Dyw w ; Bw w], then single lane-dense store.
    net_out = jnp.dot(Ww_ref[...], w, preferred_element_type=f32)
    out_ref[...] = (sys_out + net_out).astype(out_ref.dtype)


def sse_static_augmentation_forward(x, u, params, *, batch_tile=512):
    """Returns (y_k, x_plus), matching SSE_StaticAugmentation.forward."""
    B, Nx = x.shape
    _, Nu = u.shape
    Ny = params["C"].shape[0]
    Nz = params["Cz"].shape[0]
    Nw = params["Bw"].shape[1]
    Nh = params["W1"].shape[0]

    # Whole batch in one step for small B; otherwise tile with a lane-dense
    # (multiple-of-128) batch tile and shard the grid across cores.
    bt = min(batch_tile, B)
    assert B % bt == 0, "batch must be divisible by the batch tile"

    # ---- host-side weight fusion (done once, outside the kernel) ----
    # Rows ordered [z ; y ; x] so the system output slab is contiguous.
    Wxu = jnp.concatenate([
        jnp.concatenate([params["Cz"], params["Dzu"]], axis=1),   # -> z
        jnp.concatenate([params["C"],  params["D"]],   axis=1),   # -> h(x,u)
        jnp.concatenate([params["A"],  params["Bsys"]], axis=1),  # -> f(x,u)
    ], axis=0)                                   # (Nz+Ny+Nx, Nx+Nu)
    Ww = jnp.concatenate([params["Dyw"], params["Bw"]], axis=0)   # (Ny+Nx, Nw)
    W1 = params["W1"]
    W2 = params["W2"]
    b1 = params["b1"].reshape(Nh, 1)             # column biases (feature-major)
    b2 = params["b2"].reshape(Nw, 1)

    # Feature-major stacked input: (Nx+Nu, B), batch on the lane axis.
    xu_t = jnp.concatenate([x, u], axis=1).T

    kernel = functools.partial(_sse_kernel, Nz=Nz)

    full = lambda arr: pl.BlockSpec(arr.shape, lambda i: (0, 0))

    out = pl.pallas_call(
        kernel,
        out_shape=jax.ShapeDtypeStruct((Ny + Nx, B), x.dtype),
        grid_spec=pltpu.PrefetchScalarGridSpec(
            num_scalar_prefetch=0,
            grid=(B // bt,),
            in_specs=[
                pl.BlockSpec((Nx + Nu, bt), lambda i: (0, i)),  # xu (tiled)
                full(Wxu), full(W1), full(b1), full(W2), full(b2), full(Ww),
            ],
            out_specs=pl.BlockSpec((Ny + Nx, bt), lambda i: (0, i)),
        ),
        compiler_params=pltpu.CompilerParams(
            dimension_semantics=("parallel",)),
    )(xu_t, Wxu, W1, b1, W2, b2, Ww)

    # Layout plumbing back to the module's (batch, features) convention.
    y_k = out[:Ny].T
    x_plus = out[Ny:].T
    return y_k, x_plus


def _reference_forward(x, u, p):
    """Pure-JAX reference mirroring the PyTorch module line by line."""
    z = x @ p["Cz"].T + u @ p["Dzu"].T          # + zeros (Dzw_is_zero)
    w = jnp.tanh(z @ p["W1"].T + p["b1"]) @ p["W2"].T + p["b2"]
    x_plus = (x @ p["A"].T + u @ p["Bsys"].T) + w @ p["Bw"].T
    y_k = (x @ p["C"].T + u @ p["D"].T) + w @ p["Dyw"].T
    return y_k, x_plus


def make_params(key, *, Nx, Nu, Ny, Nz, Nw, Nh, scale=0.001):
    """Deterministic parameter init (mimics `initial_scaling_factor*rand`)."""
    ks = jax.random.split(key, 12)
    uni = lambda k, s: scale * jax.random.uniform(k, s, dtype=jnp.float32)
    return {
        # augmentation parameters (shapes from __init__)
        "Bw":  uni(ks[0], (Nx, Nw)),
        "Cz":  uni(ks[1], (Nz, Nx)),
        "Dzu": uni(ks[2], (Nz, Nu)),
        "Dyw": uni(ks[3], (Ny, Nw)),
        # known linear system
        "A":    jax.random.normal(ks[4], (Nx, Nx), jnp.float32) * 0.1,
        "Bsys": jax.random.normal(ks[5], (Nx, Nu), jnp.float32) * 0.1,
        "C":    jax.random.normal(ks[6], (Ny, Nx), jnp.float32) * 0.1,
        "D":    jax.random.normal(ks[7], (Ny, Nu), jnp.float32) * 0.1,
        # static wnet (MLP: Nz -> Nh -> Nw)
        "W1": jax.random.normal(ks[8], (Nh, Nz), jnp.float32) * 0.1,
        "b1": jax.random.normal(ks[9], (1, Nh), jnp.float32) * 0.1,
        "W2": jax.random.normal(ks[10], (Nw, Nh), jnp.float32) * 0.1,
        "b2": jax.random.normal(ks[11], (1, Nw), jnp.float32) * 0.1,
    }


if __name__ == "__main__":
    Nx, Nu, Ny, Nz, Nw, Nh = 32, 8, 4, 16, 8, 32

    key = jax.random.PRNGKey(0)
    kx, ku, kp, kx2, ku2 = jax.random.split(key, 5)
    params = make_params(kp, Nx=Nx, Nu=Nu, Ny=Ny, Nz=Nz, Nw=Nw, Nh=Nh)

    # --- small demo batch: whole batch in a single grid step ---
    B = 16
    x = jax.random.normal(kx, (B, Nx), jnp.float32)
    u = jax.random.normal(ku, (B, Nu), jnp.float32)
    y_k, x_plus = sse_static_augmentation_forward(x, u, params)
    jax.block_until_ready((y_k, x_plus))
    y_ref, xp_ref = _reference_forward(x, u, params)
    assert jnp.allclose(y_k, y_ref, atol=1e-5, rtol=1e-5)
    assert jnp.allclose(x_plus, xp_ref, atol=1e-5, rtol=1e-5)

    # --- larger batch: exercises the tiled, lane-dense (128-wide) grid path ---
    B2 = 256
    x2 = jax.random.normal(kx2, (B2, Nx), jnp.float32)
    u2 = jax.random.normal(ku2, (B2, Nu), jnp.float32)
    y2, xp2 = sse_static_augmentation_forward(x2, u2, params, batch_tile=128)
    jax.block_until_ready((y2, xp2))
    y2_ref, xp2_ref = _reference_forward(x2, u2, params)
    assert jnp.allclose(y2, y2_ref, atol=1e-5, rtol=1e-5)
    assert jnp.allclose(xp2, xp2_ref, atol=1e-5, rtol=1e-5)

    print("KERNEL_OK")
</pallas_src>

<mosaic_0001>
module attributes {stable_mosaic.version = 11 : i64} {
  func.func @_sse_kernel(%arg0: i32, %arg1: memref<40x16xf32, #tpu.memory_space<vmem>>, %arg2: memref<52x40xf32, #tpu.memory_space<vmem>>, %arg3: memref<32x16xf32, #tpu.memory_space<vmem>>, %arg4: memref<32x1xf32, #tpu.memory_space<vmem>>, %arg5: memref<8x32xf32, #tpu.memory_space<vmem>>, %arg6: memref<8x1xf32, #tpu.memory_space<vmem>>, %arg7: memref<36x8xf32, #tpu.memory_space<vmem>>, %arg8: memref<36x16xf32, #tpu.memory_space<vmem>>) attributes {dimension_semantics = [#tpu.dimension_semantics<parallel>], iteration_bounds = array<i64: 1>, scalar_prefetch = 0 : i64, scratch_operands = 0 : i64, tpu.core_type = #tpu.core_type<tc>, window_params = [{transform_indices = @transform_0, window_bounds = array<i64: 40, 16>}, {pipeline_mode = #tpu.pipeline_mode<synchronous>, transform_indices = @transform_1, window_bounds = array<i64: 52, 40>}, {pipeline_mode = #tpu.pipeline_mode<synchronous>, transform_indices = @transform_2, window_bounds = array<i64: 32, 16>}, {pipeline_mode = #tpu.pipeline_mode<synchronous>, transform_indices = @transform_3, window_bounds = array<i64: 32, 1>}, {pipeline_mode = #tpu.pipeline_mode<synchronous>, transform_indices = @transform_4, window_bounds = array<i64: 8, 32>}, {pipeline_mode = #tpu.pipeline_mode<synchronous>, transform_indices = @transform_5, window_bounds = array<i64: 8, 1>}, {pipeline_mode = #tpu.pipeline_mode<synchronous>, transform_indices = @transform_6, window_bounds = array<i64: 36, 8>}, {transform_indices = @transform_7, window_bounds = array<i64: 36, 16>}]} {
    %c0 = arith.constant 0 : index
    %c0_0 = arith.constant 0 : index
    %0 = vector.load %arg1[%c0, %c0_0] : memref<40x16xf32, #tpu.memory_space<vmem>>, vector<40x16xf32>
    %c0_1 = arith.constant 0 : index
    %c0_2 = arith.constant 0 : index
    %1 = vector.load %arg2[%c0_1, %c0_2] : memref<52x40xf32, #tpu.memory_space<vmem>>, vector<52x40xf32>
    %cst = arith.constant dense<0.000000e+00> : vector<52x16xf32>
    %2 = tpu.matmul %1, %0, %cst {dimension_numbers = #tpu.dot_dimension_numbers<[1], [0], [0], [1], [0, 0, 1, 1], [], []>} : vector<52x40xf32>, vector<40x16xf32>, vector<52x16xf32> -> vector<52x16xf32>
    %3 = vector.extract_strided_slice %2 {offsets = [0, 0], sizes = [16, 16], strides = [1, 1]} : vector<52x16xf32> to vector<16x16xf32>
    %4 = vector.extract_strided_slice %2 {offsets = [16, 0], sizes = [36, 16], strides = [1, 1]} : vector<52x16xf32> to vector<36x16xf32>
    %c0_3 = arith.constant 0 : index
    %c0_4 = arith.constant 0 : index
    %5 = vector.load %arg3[%c0_3, %c0_4] : memref<32x16xf32, #tpu.memory_space<vmem>>, vector<32x16xf32>
    %cst_5 = arith.constant dense<0.000000e+00> : vector<32x16xf32>
    %6 = tpu.matmul %5, %3, %cst_5 {dimension_numbers = #tpu.dot_dimension_numbers<[1], [0], [0], [1], [0, 0, 1, 1], [], []>} : vector<32x16xf32>, vector<16x16xf32>, vector<32x16xf32> -> vector<32x16xf32>
    %c0_6 = arith.constant 0 : index
    %c0_7 = arith.constant 0 : index
    %7 = vector.load %arg4[%c0_6, %c0_7] : memref<32x1xf32, #tpu.memory_space<vmem>>, vector<32x1xf32>
    %8 = vector.broadcast %7 : vector<32x1xf32> to vector<32x16xf32>
    %9 = arith.addf %6, %8 : vector<32x16xf32>
    %10 = math.tanh %9 : vector<32x16xf32>
    %c0_8 = arith.constant 0 : index
    %c0_9 = arith.constant 0 : index
    %11 = vector.load %arg5[%c0_8, %c0_9] : memref<8x32xf32, #tpu.memory_space<vmem>>, vector<8x32xf32>
    %cst_10 = arith.constant dense<0.000000e+00> : vector<8x16xf32>
    %12 = tpu.matmul %11, %10, %cst_10 {dimension_numbers = #tpu.dot_dimension_numbers<[1], [0], [0], [1], [0, 0, 1, 1], [], []>} : vector<8x32xf32>, vector<32x16xf32>, vector<8x16xf32> -> vector<8x16xf32>
    %c0_11 = arith.constant 0 : index
    %c0_12 = arith.constant 0 : index
    %13 = vector.load %arg6[%c0_11, %c0_12] : memref<8x1xf32, #tpu.memory_space<vmem>>, vector<8x1xf32>
    %14 = vector.broadcast %13 : vector<8x1xf32> to vector<8x16xf32>
    %15 = arith.addf %12, %14 : vector<8x16xf32>
    %c0_13 = arith.constant 0 : index
    %c0_14 = arith.constant 0 : index
    %16 = vector.load %arg7[%c0_13, %c0_14] : memref<36x8xf32, #tpu.memory_space<vmem>>, vector<36x8xf32>
    %cst_15 = arith.constant dense<0.000000e+00> : vector<36x16xf32>
    %17 = tpu.matmul %16, %15, %cst_15 {dimension_numbers = #tpu.dot_dimension_numbers<[1], [0], [0], [1], [0, 0, 1, 1], [], []>} : vector<36x8xf32>, vector<8x16xf32>, vector<36x16xf32> -> vector<36x16xf32>
    %18 = arith.addf %4, %17 : vector<36x16xf32>
    %c0_16 = arith.constant 0 : index
    %c0_17 = arith.constant 0 : index
    %19 = vector.load %arg8[%c0_16, %c0_17] : memref<36x16xf32, #tpu.memory_space<vmem>>, vector<36x16xf32>
    tpu.vector_store %arg8[%c0_16, %c0_17], %18 {strides = array<i32>} : memref<36x16xf32, #tpu.memory_space<vmem>>, vector<36x16xf32>,
    return
  }
  func.func @transform_0(%arg0: i32) -> (i32, i32) {
    %c0_i32 = arith.constant 0 : i32
    %c0_i32_0 = arith.constant 0 : i32
    return %c0_i32, %arg0 : i32, i32
  }
  func.func @transform_1(%arg0: i32) -> (i32, i32) {
    %c0_i32 = arith.constant 0 : i32
    %c0_i32_0 = arith.constant 0 : i32
    %c0_i32_1 = arith.constant 0 : i32
    return %c0_i32, %c0_i32_0 : i32, i32
  }
  func.func @transform_2(%arg0: i32) -> (i32, i32) {
    %c0_i32 = arith.constant 0 : i32
    %c0_i32_0 = arith.constant 0 : i32
    %c0_i32_1 = arith.constant 0 : i32
    return %c0_i32, %c0_i32_0 : i32, i32
  }
  func.func @transform_3(%arg0: i32) -> (i32, i32) {
    %c0_i32 = arith.constant 0 : i32
    %c0_i32_0 = arith.constant 0 : i32
    %c0_i32_1 = arith.constant 0 : i32
    return %c0_i32, %c0_i32_0 : i32, i32
  }
  func.func @transform_4(%arg0: i32) -> (i32, i32) {
    %c0_i32 = arith.constant 0 : i32
    %c0_i32_0 = arith.constant 0 : i32
    %c0_i32_1 = arith.constant 0 : i32
    return %c0_i32, %c0_i32_0 : i32, i32
  }
  func.func @transform_5(%arg0: i32) -> (i32, i32) {
    %c0_i32 = arith.constant 0 : i32
    %c0_i32_0 = arith.constant 0 : i32
    %c0_i32_1 = arith.constant 0 : i32
    return %c0_i32, %c0_i32_0 : i32, i32
  }
  func.func @transform_6(%arg0: i32) -> (i32, i32) {
    %c0_i32 = arith.constant 0 : i32
    %c0_i32_0 = arith.constant 0 : i32
    %c0_i32_1 = arith.constant 0 : i32
    return %c0_i32, %c0_i32_0 : i32, i32
  }
  func.func @transform_7(%arg0: i32) -> (i32, i32) {
    %c0_i32 = arith.constant 0 : i32
    %c0_i32_0 = arith.constant 0 : i32
    return %c0_i32, %arg0 : i32, i32
  }
}

</mosaic_0001>

<llo_original>
// kernel: tpu_custom_call.1
$region0: #{tpu_custom_call.1}
  #allocation0 [shape = 'u32[]', space=smem, size = 0x4, offset = 0x4, fixed_abs, tag = 'smem constant byte address 0x4 - core index']
  #allocation1 [shape = 'u32[144,128]{1,0:T(1,128)}', space=vmem, size = 0x12000, scoped, tag = 'internal scratch']
  %s0 = inlined_call_operand.vmem [shape: f32[40,16], index: 0, kind: input, shape index: {}]
  %s1 = inlined_call_operand.vmem [shape: f32[52,40], index: 1, kind: input, shape index: {}]
  %s2 = inlined_call_operand.vmem [shape: f32[32,16], index: 2, kind: input, shape index: {}]
  %s3 = inlined_call_operand.vmem [shape: f32[32,1], index: 3, kind: input, shape index: {}]
  %s4 = inlined_call_operand.vmem [shape: f32[8,32], index: 4, kind: input, shape index: {}]
  %s5 = inlined_call_operand.vmem [shape: f32[8,1], index: 5, kind: input, shape index: {}]
  %s6 = inlined_call_operand.vmem [shape: f32[36,8], index: 6, kind: input, shape index: {}]
  %s7 = inlined_call_operand.vmem [shape: f32[36,16], index: 7, kind: output, shape index: {}]
  %s8 = sld [smem:[#allocation0]]
  $region38: #{tpu_custom_call.1} parent=0
    _
  %s10 = ssub.s32 1, %s8
  %s11 = scalar_select 0, %s10, %s8
  // Predicated region
  $region2: #{tpu_custom_call.1} parent=0 // pred_check
    _
  $region3: #{tpu_custom_call.1} parent=0 // pred_check_branch
    %13 = sbr.rel (0) target = $region5
  $region4: #{tpu_custom_call.1} parent=0 // pred_region
    _
  $region5: #{tpu_custom_call.1} parent=0 // pred_fallthru
    _
  // Predicated region
  $region6: #{tpu_custom_call.1} parent=0 // pred_check
    _
  $region7: #{tpu_custom_call.1} parent=0 // pred_check_branch
    %15 = sbr.rel (0) target = $region9
  $region8: #{tpu_custom_call.1} parent=0 // pred_region
    _
  $region9: #{tpu_custom_call.1} parent=0 // pred_fallthru
    _
  // Predicated region
  $region10: #{tpu_custom_call.1} parent=0 // pred_check
    _
  $region11: #{tpu_custom_call.1} parent=0 // pred_check_branch
    %17 = sbr.rel (0) target = $region13
  $region12: #{tpu_custom_call.1} parent=0 // pred_region
    _
  $region13: #{tpu_custom_call.1} parent=0 // pred_fallthru
    _
  // Predicated region
  $region14: #{tpu_custom_call.1} parent=0 // pred_check
    _
  $region15: #{tpu_custom_call.1} parent=0 // pred_check_branch
    %19 = sbr.rel (0) target = $region17
  $region16: #{tpu_custom_call.1} parent=0 // pred_region
    _
  $region17: #{tpu_custom_call.1} parent=0 // pred_fallthru
    _
  // Predicated region
  $region18: #{tpu_custom_call.1} parent=0 // pred_check
    _
  $region19: #{tpu_custom_call.1} parent=0 // pred_check_branch
    %21 = sbr.rel (0) target = $region21
  $region20: #{tpu_custom_call.1} parent=0 // pred_region
    _
  $region21: #{tpu_custom_call.1} parent=0 // pred_fallthru
    _
  // Predicated region
  $region22: #{tpu_custom_call.1} parent=0 // pred_check
    _
  $region23: #{tpu_custom_call.1} parent=0 // pred_check_branch
    %23 = sbr.rel (0) target = $region25
  $region24: #{tpu_custom_call.1} parent=0 // pred_region
    _
  $region25: #{tpu_custom_call.1} parent=0 // pred_fallthru
    _
  // Predicated region
  $region26: #{tpu_custom_call.1} parent=0 // pred_check
    _
  $region27: #{tpu_custom_call.1} parent=0 // pred_check_branch
    %25 = sbr.rel (0) target = $region29
  $region28: #{tpu_custom_call.1} parent=0 // pred_region
    _
  $region29: #{tpu_custom_call.1} parent=0 // pred_fallthru
    _
  %v26 = vld [vmem:[%s0] sm:$0xff]
  %v27 = vld [vmem:[%s0 + $0x8] sm:$0xff]
  %v28 = vld [vmem:[%s0 + $0x10] sm:$0xff]
  %v29 = vld [vmem:[%s0 + $0x18] sm:$0xff]
  %v30 = vld [vmem:[%s0 + $0x20] sm:$0xff]
  %v31 = vld [vmem:[%s1] sm:$0xff]
  %v32 = vld [vmem:[%s1 + $0x8] sm:$0xff]
  %v33 = vld [vmem:[%s1 + $0x10] sm:$0xff]
  %v34 = vld [vmem:[%s1 + $0x18] sm:$0xff]
  %v35 = vld [vmem:[%s1 + $0x20] sm:$0xff]
  %v36 = vld [vmem:[%s1 + $0x28] sm:$0xff]
  %v37 = vld [vmem:[%s1 + $0x30] sm:$0xf]
  %vm38 = vcmask 326656
  %v40 = vsel %vm38, %v31, 0
  %v43 = vsel %vm38, %v32, 0
  %v46 = vsel %vm38, %v33, 0
  %v49 = vsel %vm38, %v34, 0
  %v52 = vsel %vm38, %v35, 0
  %v55 = vsel %vm38, %v36, 0
  %v58 = vsel %vm38, %v37, 0
  %60 = vmatprep.subr.mxu0 0.0
  %61 = vmatpush1.msra.mxu0 %v26
  %62 = vmatprep.subr.mxu0 0.0
  %63 = vmatpush1.msra.mxu0 %v27
  %64 = vmatprep.subr.mxu0 0.0
  %65 = vmatpush1.msra.mxu0 %v28
  %66 = vmatprep.subr.mxu0 0.0
  %67 = vmatpush1.msra.mxu0 %v29
  %68 = vmatprep.subr.mxu0 0.0
  %69 = vmatpush1.msra.mxu0 %v30
  %70 = vmatprep.subr.mxu0 0.0
  %71 = vmatpush1.msra.mxu0 0.0
  %72 = vmatprep.subr.mxu0 0.0
  %73 = vmatpush1.msra.mxu0 0.0
  %74 = vmatprep.subr.mxu0 0.0
  %75 = vmatpush1.msra.mxu0 0.0
  %76 = vmatprep.subr.mxu0 0.0
  %77 = vmatpush1.msra.mxu0 0.0
  %78 = vmatprep.subr.mxu0 0.0
  %79 = vmatpush1.msra.mxu0 0.0
  %80 = vmatprep.subr.mxu0 0.0
  %81 = vmatpush1.msra.mxu0 0.0
  %82 = vmatprep.subr.mxu0 0.0
  %83 = vmatpush1.msra.mxu0 0.0
  %84 = vmatprep.subr.mxu0 0.0
  %85 = vmatpush1.msra.mxu0 0.0
  %86 = vmatprep.subr.mxu0 0.0
  %87 = vmatpush1.msra.mxu0 0.0
  %88 = vmatprep.subr.mxu0 0.0
  %89 = vmatpush1.msra.mxu0 0.0
  %90 = vmatprep.subr.mxu0 0.0
  %91 = vmatpush1.msra.mxu0 0.0
  %92 = vmatprep.subr.mxu0 0.0
  %93 = vmatpush1.msra.mxu0 0.0
  %94 = vmatprep.subr.mxu0 0.0
  %95 = vmatpush1.msra.mxu0 0.0
  %96 = vmatprep.subr.mxu0 0.0
  %97 = vmatpush1.msra.mxu0 0.0
  %98 = vmatprep.subr.mxu0 0.0
  %99 = vmatpush1.msra.mxu0 0.0
  %100 = vmatprep.subr.mxu0 0.0
  %101 = vmatpush1.msra.mxu0 0.0
  %102 = vmatprep.subr.mxu0 0.0
  %103 = vmatpush1.msra.mxu0 0.0
  %104 = vmatprep.subr.mxu0 0.0
  %105 = vmatpush1.msra.mxu0 0.0
  %106 = vmatprep.subr.mxu0 0.0
  %107 = vmatpush1.msra.mxu0 0.0
  %108 = vmatprep.subr.mxu0 0.0
  %109 = vmatpush1.msra.mxu0 0.0
  %110 = vmatprep.subr.mxu0 0.0
  %111 = vmatpush1.msra.mxu0 0.0
  %112 = vmatprep.subr.mxu0 0.0
  %113 = vmatpush1.msra.mxu0 0.0
  %114 = vmatprep.subr.mxu0 0.0
  %115 = vmatpush1.msra.mxu0 0.0
  %116 = vmatprep.subr.mxu0 0.0
  %117 = vmatpush1.msra.mxu0 0.0
  %118 = vmatprep.subr.mxu0 0.0
  %119 = vmatpush1.msra.mxu0 0.0
  %120 = vmatprep.subr.mxu0 0.0
  %121 = vmatpush1.msra.mxu0 0.0
  %122 = vmatprep.subr.mxu0 0.0
  %123 = vmatpush1.msra.mxu0 0.0
  %124 = vmatprep.mubr.f32.mxu0 0.0
  %125 = vmatmul.mubr.f32.gmra.mrb[0].mxu0 %v40
  %v126 = vpop.f32.mrb[0].mxu0
  %v127 = vadd.f32 0.0, %v126
  %v128 = vpop.f32.mrb[0].mxu0
  %129 = vmatprep.mubr.f32.mxu0 0.0
  %130 = vmatmul.mubr.f32.gmra.mrb[0].mxu0 %v43
  %v131 = vpop.f32.mrb[0].mxu0
  %v132 = vadd.f32 0.0, %v131
  %v133 = vpop.f32.mrb[0].mxu0
  %134 = vmatprep.mubr.f32.mxu0 0.0
  %135 = vmatmul.mubr.f32.gmra.mrb[0].mxu0 %v46
  %v136 = vpop.f32.mrb[0].mxu0
  %v137 = vadd.f32 0.0, %v136
  %v138 = vpop.f32.mrb[0].mxu0
  %139 = vmatprep.mubr.f32.mxu0 0.0
  %140 = vmatmul.mubr.f32.gmra.mrb[0].mxu0 %v49
  %v141 = vpop.f32.mrb[0].mxu0
  %v142 = vadd.f32 0.0, %v141
  %v143 = vpop.f32.mrb[0].mxu0
  %144 = vmatprep.mubr.f32.mxu0 0.0
  %145 = vmatmul.mubr.f32.gmra.mrb[0].mxu0 %v52
  %v146 = vpop.f32.mrb[0].mxu0
  %v147 = vadd.f32 0.0, %v146
  %v148 = vpop.f32.mrb[0].mxu0
  %149 = vmatprep.mubr.f32.mxu0 0.0
  %150 = vmatmul.mubr.f32.gmra.mrb[0].mxu0 %v55
  %v151 = vpop.f32.mrb[0].mxu0
  %v152 = vadd.f32 0.0, %v151
  %v153 = vpop.f32.mrb[0].mxu0
  %154 = vmatprep.mubr.f32.mxu0 0.0
  %155 = vmatmul.mubr.f32.gmra.mrb[0].mxu0 %v58
  %v156 = vpop.f32.mrb[0].mxu0
  %v157 = vadd.f32 0.0, %v156
  %v158 = vpop.f32.mrb[0].mxu0
  %159 = vdwg.mxu0
  %v160 = vld [vmem:[%s2] sm:$0xff]
  %v161 = vld [vmem:[%s2 + $0x8] sm:$0xff]
  %v162 = vld [vmem:[%s2 + $0x10] sm:$0xff]
  %v163 = vld [vmem:[%s2 + $0x18] sm:$0xff]
  %v164 = vld [vmem:[%s3] sm:$0xff]
  %v165 = vld [vmem:[%s3 + $0x8] sm:$0xff]
  %v166 = vld [vmem:[%s3 + $0x10] sm:$0xff]
  %v167 = vld [vmem:[%s3 + $0x18] sm:$0xff]
  %169 = vset.pattern.permute.xlu0 0
  %170 = vperm.xlu0 %169, %v164
  %v171 = vpop.permute.xlu0 %170
  %174 = vset.pattern.permute.xlu0 0
  %175 = vperm.xlu0 %174, %v165
  %v176 = vpop.permute.xlu0 %175
  %179 = vset.pattern.permute.xlu0 0
  %180 = vperm.xlu0 %179, %v166
  %v181 = vpop.permute.xlu0 %180
  %184 = vset.pattern.permute.xlu0 0
  %185 = vperm.xlu0 %184, %v167
  %v186 = vpop.permute.xlu0 %185
  %vm188 = vcmask 130048
  %v190 = vsel %vm188, %v160, 0
  %v193 = vsel %vm188, %v161, 0
  %v196 = vsel %vm188, %v162, 0
  %v199 = vsel %vm188, %v163, 0
  %201 = vmatprep.subr.mxu0 0.0
  %202 = vmatpush1.msra.mxu0 %v127
  %203 = vmatprep.subr.mxu0 0.0
  %204 = vmatpush1.msra.mxu0 %v132
  %205 = vmatprep.subr.mxu0 0.0
  %206 = vmatpush1.msra.mxu0 0.0
  %207 = vmatprep.subr.mxu0 0.0
  %208 = vmatpush1.msra.mxu0 0.0
  %209 = vmatprep.subr.mxu0 0.0
  %210 = vmatpush1.msra.mxu0 0.0
  %211 = vmatprep.subr.mxu0 0.0
  %212 = vmatpush1.msra.mxu0 0.0
  %213 = vmatprep.subr.mxu0 0.0
  %214 = vmatpush1.msra.mxu0 0.0
  %215 = vmatprep.subr.mxu0 0.0
  %216 = vmatpush1.msra.mxu0 0.0
  %217 = vmatprep.subr.mxu0 0.0
  %218 = vmatpush1.msra.mxu0 0.0
  %219 = vmatprep.subr.mxu0 0.0
  %220 = vmatpush1.msra.mxu0 0.0
  %221 = vmatprep.subr.mxu0 0.0
  %222 = vmatpush1.msra.mxu0 0.0
  %223 = vmatprep.subr.mxu0 0.0
  %224 = vmatpush1.msra.mxu0 0.0
  %225 = vmatprep.subr.mxu0 0.0
  %226 = vmatpush1.msra.mxu0 0.0
  %227 = vmatprep.subr.mxu0 0.0
  %228 = vmatpush1.msra.mxu0 0.0
  %229 = vmatprep.subr.mxu0 0.0
  %230 = vmatpush1.msra.mxu0 0.0
  %231 = vmatprep.subr.mxu0 0.0
  %232 = vmatpush1.msra.mxu0 0.0
  %233 = vmatprep.subr.mxu0 0.0
  %234 = vmatpush1.msra.mxu0 0.0
  %235 = vmatprep.subr.mxu0 0.0
  %236 = vmatpush1.msra.mxu0 0.0
  %237 = vmatprep.subr.mxu0 0.0
  %238 = vmatpush1.msra.mxu0 0.0
  %239 = vmatprep.subr.mxu0 0.0
  %240 = vmatpush1.msra.mxu0 0.0
  %241 = vmatprep.subr.mxu0 0.0
  %242 = vmatpush1.msra.mxu0 0.0
  %243 = vmatprep.subr.mxu0 0.0
  %244 = vmatpush1.msra.mxu0 0.0
  %245 = vmatprep.subr.mxu0 0.0
  %246 = vmatpush1.msra.mxu0 0.0
  %247 = vmatprep.subr.mxu0 0.0
  %248 = vmatpush1.msra.mxu0 0.0
  %249 = vmatprep.subr.mxu0 0.0
  %250 = vmatpush1.msra.mxu0 0.0
  %251 = vmatprep.subr.mxu0 0.0
  %252 = vmatpush1.msra.mxu0 0.0
  %253 = vmatprep.subr.mxu0 0.0
  %254 = vmatpush1.msra.mxu0 0.0
  %255 = vmatprep.subr.mxu0 0.0
  %256 = vmatpush1.msra.mxu0 0.0
  %257 = vmatprep.subr.mxu0 0.0
  %258 = vmatpush1.msra.mxu0 0.0
  %259 = vmatprep.subr.mxu0 0.0
  %260 = vmatpush1.msra.mxu0 0.0
  %261 = vmatprep.subr.mxu0 0.0
  %262 = vmatpush1.msra.mxu0 0.0
  %263 = vmatprep.subr.mxu0 0.0
  %264 = vmatpush1.msra.mxu0 0.0
  %265 = vmatprep.mubr.f32.mxu0 0.0
  %266 = vmatmul.mubr.f32.gmra.mrb[0].mxu0 %v190
  %v267 = vpop.f32.mrb[0].mxu0
  %v268 = vadd.f32 %v171, %v267
  %v269 = vpop.f32.mrb[0].mxu0
  %270 = vmatprep.mubr.f32.mxu0 0.0
  %271 = vmatmul.mubr.f32.gmra.mrb[0].mxu0 %v193
  %v272 = vpop.f32.mrb[0].mxu0
  %v273 = vadd.f32 %v176, %v272
  %v274 = vpop.f32.mrb[0].mxu0
  %275 = vmatprep.mubr.f32.mxu0 0.0
  %276 = vmatmul.mubr.f32.gmra.mrb[0].mxu0 %v196
  %v277 = vpop.f32.mrb[0].mxu0
  %v278 = vadd.f32 %v181, %v277
  %v279 = vpop.f32.mrb[0].mxu0
  %280 = vmatprep.mubr.f32.mxu0 0.0
  %281 = vmatmul.mubr.f32.gmra.mrb[0].mxu0 %v199
  %v282 = vpop.f32.mrb[0].mxu0
  %v283 = vadd.f32 %v186, %v282
  %v284 = vpop.f32.mrb[0].mxu0
  %285 = vdwg.mxu0
  %v286 = vtanh.pop %v268
  %v287 = vtanh.pop %v273
  %v288 = vtanh.pop %v278
  %v289 = vtanh.pop %v283
  %v290 = vld [vmem:[%s4] sm:$0xff]
  %v291 = vld [vmem:[%s5] sm:$0xff]
  %293 = vset.pattern.permute.xlu0 0
  %294 = vperm.xlu0 %293, %v291
  %v295 = vpop.permute.xlu0 %294
  %vm297 = vcmask 261120
  %v299 = vsel %vm297, %v290, 0
  %301 = vmatprep.subr.mxu0 0.0
  %302 = vmatpush1.msra.mxu0 %v286
  %303 = vmatprep.subr.mxu0 0.0
  %304 = vmatpush1.msra.mxu0 %v287
  %305 = vmatprep.subr.mxu0 0.0
  %306 = vmatpush1.msra.mxu0 %v288
  %307 = vmatprep.subr.mxu0 0.0
  %308 = vmatpush1.msra.mxu0 %v289
  %309 = vmatprep.subr.mxu0 0.0
  %310 = vmatpush1.msra.mxu0 0.0
  %311 = vmatprep.subr.mxu0 0.0
  %312 = vmatpush1.msra.mxu0 0.0
  %313 = vmatprep.subr.mxu0 0.0
  %314 = vmatpush1.msra.mxu0 0.0
  %315 = vmatprep.subr.mxu0 0.0
  %316 = vmatpush1.msra.mxu0 0.0
  %317 = vmatprep.subr.mxu0 0.0
  %318 = vmatpush1.msra.mxu0 0.0
  %319 = vmatprep.subr.mxu0 0.0
  %320 = vmatpush1.msra.mxu0 0.0
  %321 = vmatprep.subr.mxu0 0.0
  %322 = vmatpush1.msra.mxu0 0.0
  %323 = vmatprep.subr.mxu0 0.0
  %324 = vmatpush1.msra.mxu0 0.0
  %325 = vmatprep.subr.mxu0 0.0
  %326 = vmatpush1.msra.mxu0 0.0
  %327 = vmatprep.subr.mxu0 0.0
  %328 = vmatpush1.msra.mxu0 0.0
  %329 = vmatprep.subr.mxu0 0.0
  %330 = vmatpush1.msra.mxu0 0.0
  %331 = vmatprep.subr.mxu0 0.0
  %332 = vmatpush1.msra.mxu0 0.0
  %333 = vmatprep.subr.mxu0 0.0
  %334 = vmatpush1.msra.mxu0 0.0
  %335 = vmatprep.subr.mxu0 0.0
  %336 = vmatpush1.msra.mxu0 0.0
  %337 = vmatprep.subr.mxu0 0.0
  %338 = vmatpush1.msra.mxu0 0.0
  %339 = vmatprep.subr.mxu0 0.0
  %340 = vmatpush1.msra.mxu0 0.0
  %341 = vmatprep.subr.mxu0 0.0
  %342 = vmatpush1.msra.mxu0 0.0
  %343 = vmatprep.subr.mxu0 0.0
  %344 = vmatpush1.msra.mxu0 0.0
  %345 = vmatprep.subr.mxu0 0.0
  %346 = vmatpush1.msra.mxu0 0.0
  %347 = vmatprep.subr.mxu0 0.0
  %348 = vmatpush1.msra.mxu0 0.0
  %349 = vmatprep.subr.mxu0 0.0
  %350 = vmatpush1.msra.mxu0 0.0
  %351 = vmatprep.subr.mxu0 0.0
  %352 = vmatpush1.msra.mxu0 0.0
  %353 = vmatprep.subr.mxu0 0.0
  %354 = vmatpush1.msra.mxu0 0.0
  %355 = vmatprep.subr.mxu0 0.0
  %356 = vmatpush1.msra.mxu0 0.0
  %357 = vmatprep.subr.mxu0 0.0
  %358 = vmatpush1.msra.mxu0 0.0
  %359 = vmatprep.subr.mxu0 0.0
  %360 = vmatpush1.msra.mxu0 0.0
  %361 = vmatprep.subr.mxu0 0.0
  %362 = vmatpush1.msra.mxu0 0.0
  %363 = vmatprep.subr.mxu0 0.0
  %364 = vmatpush1.msra.mxu0 0.0
  %365 = vmatprep.mubr.f32.mxu0 0.0
  %366 = vmatmul.mubr.f32.gmra.mrb[0].mxu0 %v299
  %v367 = vpop.f32.mrb[0].mxu0
  %v368 = vadd.f32 %v295, %v367
  %v369 = vpop.f32.mrb[0].mxu0
  %370 = vdwg.mxu0
  %v371 = vld [vmem:[%s6] sm:$0xff]
  %v372 = vld [vmem:[%s6 + $0x8] sm:$0xff]
  %v373 = vld [vmem:[%s6 + $0x10] sm:$0xff]
  %v374 = vld [vmem:[%s6 + $0x18] sm:$0xff]
  %v375 = vld [vmem:[%s6 + $0x20] sm:$0xf]
  %vm376 = vcmask 64512
  %v378 = vsel %vm376, %v371, 0
  %v381 = vsel %vm376, %v372, 0
  %v384 = vsel %vm376, %v373, 0
  %v387 = vsel %vm376, %v374, 0
  %v390 = vsel %vm376, %v375, 0
  %392 = vmatprep.subr.mxu0 0.0
  %393 = vmatpush1.msra.mxu0 %v368
  %394 = vmatprep.subr.mxu0 0.0
  %395 = vmatpush1.msra.mxu0 0.0
  %396 = vmatprep.subr.mxu0 0.0
  %397 = vmatpush1.msra.mxu0 0.0
  %398 = vmatprep.subr.mxu0 0.0
  %399 = vmatpush1.msra.mxu0 0.0
  %400 = vmatprep.subr.mxu0 0.0
  %401 = vmatpush1.msra.mxu0 0.0
  %402 = vmatprep.subr.mxu0 0.0
  %403 = vmatpush1.msra.mxu0 0.0
  %404 = vmatprep.subr.mxu0 0.0
  %405 = vmatpush1.msra.mxu0 0.0
  %406 = vmatprep.subr.mxu0 0.0
  %407 = vmatpush1.msra.mxu0 0.0
  %408 = vmatprep.subr.mxu0 0.0
  %409 = vmatpush1.msra.mxu0 0.0
  %410 = vmatprep.subr.mxu0 0.0
  %411 = vmatpush1.msra.mxu0 0.0
  %412 = vmatprep.subr.mxu0 0.0
  %413 = vmatpush1.msra.mxu0 0.0
  %414 = vmatprep.subr.mxu0 0.0
  %415 = vmatpush1.msra.mxu0 0.0
  %416 = vmatprep.subr.mxu0 0.0
  %417 = vmatpush1.msra.mxu0 0.0
  %418 = vmatprep.subr.mxu0 0.0
  %419 = vmatpush1.msra.mxu0 0.0
  %420 = vmatprep.subr.mxu0 0.0
  %421 = vmatpush1.msra.mxu0 0.0
  %422 = vmatprep.subr.mxu0 0.0
  %423 = vmatpush1.msra.mxu0 0.0
  %424 = vmatprep.subr.mxu0 0.0
  %425 = vmatpush1.msra.mxu0 0.0
  %426 = vmatprep.subr.mxu0 0.0
  %427 = vmatpush1.msra.mxu0 0.0
  %428 = vmatprep.subr.mxu0 0.0
  %429 = vmatpush1.msra.mxu0 0.0
  %430 = vmatprep.subr.mxu0 0.0
  %431 = vmatpush1.msra.mxu0 0.0
  %432 = vmatprep.subr.mxu0 0.0
  %433 = vmatpush1.msra.mxu0 0.0
  %434 = vmatprep.subr.mxu0 0.0
  %435 = vmatpush1.msra.mxu0 0.0
  %436 = vmatprep.subr.mxu0 0.0
  %437 = vmatpush1.msra.mxu0 0.0
  %438 = vmatprep.subr.mxu0 0.0
  %439 = vmatpush1.msra.mxu0 0.0
  %440 = vmatprep.subr.mxu0 0.0
  %441 = vmatpush1.msra.mxu0 0.0
  %442 = vmatprep.subr.mxu0 0.0
  %443 = vmatpush1.msra.mxu0 0.0
  %444 = vmatprep.subr.mxu0 0.0
  %445 = vmatpush1.msra.mxu0 0.0
  %446 = vmatprep.subr.mxu0 0.0
  %447 = vmatpush1.msra.mxu0 0.0
  %448 = vmatprep.subr.mxu0 0.0
  %449 = vmatpush1.msra.mxu0 0.0
  %450 = vmatprep.subr.mxu0 0.0
  %451 = vmatpush1.msra.mxu0 0.0
  %452 = vmatprep.subr.mxu0 0.0
  %453 = vmatpush1.msra.mxu0 0.0
  %454 = vmatprep.subr.mxu0 0.0
  %455 = vmatpush1.msra.mxu0 0.0
  %456 = vmatprep.mubr.f32.mxu0 0.0
  %457 = vmatmul.mubr.f32.gmra.mrb[0].mxu0 %v378
  %v458 = vpop.f32.mrb[0].mxu0
  %v459 = vadd.f32 0.0, %v458
  %v460 = vpop.f32.mrb[0].mxu0
  %461 = vmatprep.mubr.f32.mxu0 0.0
  %462 = vmatmul.mubr.f32.gmra.mrb[0].mxu0 %v381
  %v463 = vpop.f32.mrb[0].mxu0
  %v464 = vadd.f32 0.0, %v463
  %v465 = vpop.f32.mrb[0].mxu0
  %466 = vmatprep.mubr.f32.mxu0 0.0
  %467 = vmatmul.mubr.f32.gmra.mrb[0].mxu0 %v384
  %v468 = vpop.f32.mrb[0].mxu0
  %v469 = vadd.f32 0.0, %v468
  %v470 = vpop.f32.mrb[0].mxu0
  %471 = vmatprep.mubr.f32.mxu0 0.0
  %472 = vmatmul.mubr.f32.gmra.mrb[0].mxu0 %v387
  %v473 = vpop.f32.mrb[0].mxu0
  %v474 = vadd.f32 0.0, %v473
  %v475 = vpop.f32.mrb[0].mxu0
  %476 = vmatprep.mubr.f32.mxu0 0.0
  %477 = vmatmul.mubr.f32.gmra.mrb[0].mxu0 %v390
  %v478 = vpop.f32.mrb[0].mxu0
  %v479 = vadd.f32 0.0, %v478
  %v480 = vpop.f32.mrb[0].mxu0
  %481 = vdwg.mxu0
  %v482 = vadd.f32 %v137, %v459
  %v483 = vadd.f32 %v142, %v464
  %v484 = vadd.f32 %v147, %v469
  %v485 = vadd.f32 %v152, %v474
  %v486 = vadd.f32 %v157, %v479
  %487 = vst.msk [vmem:[%s7] sm:$0xff] %vm188, %v482
  %488 = vst.msk [vmem:[%s7 + $0x8] sm:$0xff] %vm188, %v483
  %489 = vst.msk [vmem:[%s7 + $0x10] sm:$0xff] %vm188, %v484
  %490 = vst.msk [vmem:[%s7 + $0x18] sm:$0xff] %vm188, %v485
  %vm491 = vcmask 125952
  %492 = vst.msk [vmem:[%s7 + $0x20] sm:$0xf] %vm491, %v486
  // Predicated region
  $region30: #{tpu_custom_call.1} parent=0 // pred_check
    _
  $region31: #{tpu_custom_call.1} parent=0 // pred_check_branch
    %494 = sbr.rel (0) target = $region33
  $region32: #{tpu_custom_call.1} parent=0 // pred_region
    _
  $region33: #{tpu_custom_call.1} parent=0 // pred_fallthru
    _
  // Predicated region
  $region34: #{tpu_custom_call.1} parent=0 // pred_check
    _
  $region35: #{tpu_custom_call.1} parent=0 // pred_check_branch
    %496 = sbr.rel (0) target = $region37
  $region36: #{tpu_custom_call.1} parent=0 // pred_region
    _
  $region37: #{tpu_custom_call.1} parent=0 // pred_fallthru
    _

</llo_original>
